<compile_context>
chip_gen: v7x
topology: tpu7x:2x2x1
jax: 0.10.0
libtpu: 0.0.40
codegen_flags: <defaults>
</compile_context>

<pallas_src>
import math

import jax
import jax.numpy as jnp
from jax.experimental import pallas as pl
from jax.experimental.pallas import tpu as pltpu


def _round_up(x, m):
    return (x + m - 1) // m * m


def critic_kernel(x_ref, w1_ref, b1_ref, w2_ref, b2_ref, w3_ref, b3_ref, o_ref):
    # x:(tb,S) f32 | w1:(S,512) bf16 | w2:(512,256) bf16
    # b1:(1,512) f32 | b2:(1,256) f32 | w3:(1,256) f32 | b3:(1,1) f32
    # o:(1,tb) f32  (lane-dense row; wrapper reshapes back to (B,1))

    # In-kernel bf16 cast of the activation: keeps a single f32 HBM read of the
    # state while feeding the MXU its native input precision (VPU convert is
    # hidden under the MXU-dominated body).
    x = x_ref[...].astype(jnp.bfloat16)

    # fc1 + ReLU  (bf16 MXU inputs, f32 accumulation / bias / activation)
    h1 = jnp.dot(x, w1_ref[...], preferred_element_type=jnp.float32) + b1_ref[...]
    h1 = jnp.maximum(h1, 0.0)

    # fc2 + ReLU
    h2 = jnp.dot(h1.astype(jnp.bfloat16), w2_ref[...],
                 preferred_element_type=jnp.float32) + b2_ref[...]
    h2 = jnp.maximum(h2, 0.0)

    # fc3 (N=1): VPU multiply + lane reduction instead of a degenerate 1-column
    # MXU pass; transpose the (tb,1) column into a lane-dense (1,tb) row so the
    # store is an unmasked full-lane vst.
    v = jnp.sum(h2 * w3_ref[...], axis=-1, keepdims=True) + b3_ref[...]   # (tb, 1)
    o_ref[...] = v.T                                                      # (1, tb)


def critic_forward(state, params, *, block_b=1024):
    """state: (B, state_size) float32 -> value: (B, 1) float32."""
    w1, b1, w2, b2, w3, b3 = params
    B, S = state.shape

    # Only the MXU-feeding weights go bf16 (halves the weight DMA);
    # biases and the fc3 row stay f32.
    w1b = w1.astype(jnp.bfloat16)
    w2b = w2.astype(jnp.bfloat16)

    # Batch tiling:
    #  * small batches: one exact-size tile (block == full array dims, always
    #    layout-legal, no padding of any kind).
    #  * larger batches: 128-multiple tiles (lane-dense output blocks, fully
    #    packed bf16 sublanes), capped at ceil(B/2) so there are >= 2 grid
    #    steps for v7x's two TensorCores; last tile may be ragged (handled by
    #    Pallas OOB-read / bounded-write semantics, no jnp.pad copy).
    block_b = max(128, _round_up(block_b, 128))
    if B <= min(block_b, 256):
        tb = B
    else:
        tb = min(block_b, max(128, _round_up(pl.cdiv(B, 2), 128)))
    n_tiles = pl.cdiv(B, tb)

    # Constant index_map -> block stays resident in VMEM across all batch tiles.
    def resident(a):
        return pl.BlockSpec(a.shape, lambda i, _nd=a.ndim: (0,) * _nd)

    rows = n_tiles * tb
    flops = 2 * rows * (S * 512 + 512 * 256 + 256)
    bytes_accessed = (state.size * 4
                      + w1b.size * 2 + w2b.size * 2
                      + (b1.size + b2.size + w3.size + b3.size) * 4
                      + rows * 4)

    out = pl.pallas_call(
        critic_kernel,
        out_shape=jax.ShapeDtypeStruct((1, rows), jnp.float32),
        grid=(n_tiles,),
        in_specs=[
            pl.BlockSpec((tb, S), lambda i: (i, 0)),    # batch tile of the state (f32)
            resident(w1b), resident(b1),
            resident(w2b), resident(b2),
            resident(w3), resident(b3),
        ],
        out_specs=pl.BlockSpec((1, tb), lambda i: (0, i)),   # lane-dense output row
        compiler_params=pltpu.CompilerParams(
            dimension_semantics=("parallel",),           # shard batch tiles across TCs (v7x)
        ),
        cost_estimate=pl.CostEstimate(
            flops=flops, transcendentals=0, bytes_accessed=bytes_accessed),
    )(state, w1b, b1, w2b, b2, w3, b3)

    return out[0, :B].reshape(B, 1)


def init_critic_params(key, state_size):
    """Deterministic init mirroring torch.nn.Linear's default U(-1/sqrt(fan_in), 1/sqrt(fan_in))."""
    def linear(key, fan_in, fan_out):
        kw, kb = jax.random.split(key)
        bound = 1.0 / math.sqrt(fan_in)
        # stored as (in, out) so the kernel does x @ W
        w = jax.random.uniform(kw, (fan_in, fan_out), jnp.float32, -bound, bound)
        b = jax.random.uniform(kb, (1, fan_out), jnp.float32, -bound, bound)
        return w, b

    k1, k2, k3 = jax.random.split(key, 3)
    w1, b1 = linear(k1, state_size, 512)
    w2, b2 = linear(k2, 512, 256)
    w3t, b3 = linear(k3, 256, 1)
    w3 = w3t.T            # fc3 kept as a (1, 256) row for the VPU reduction
    b3 = b3.reshape(1, 1)
    return (w1, b1, w2, b2, w3, b3)


def critic_reference(state, params):
    """Plain-JAX reference using the same bf16-input / f32-accumulate math."""
    w1, b1, w2, b2, w3, b3 = params
    xb = state.astype(jnp.bfloat16)
    h1 = jnp.maximum(
        jnp.dot(xb, w1.astype(jnp.bfloat16), preferred_element_type=jnp.float32) + b1, 0.0)
    h2 = jnp.maximum(
        jnp.dot(h1.astype(jnp.bfloat16), w2.astype(jnp.bfloat16),
                preferred_element_type=jnp.float32) + b2, 0.0)
    return jnp.sum(h2 * w3, axis=-1, keepdims=True) + b3


if __name__ == "__main__":
    key = jax.random.PRNGKey(0)
    k_params, k_state, k_state2 = jax.random.split(key, 3)

    STATE_SIZE = 32
    params = init_critic_params(k_params, STATE_SIZE)

    # Small batch: single exact-size tile (block == full array dims).
    B = 8
    state = jax.random.normal(k_state, (B, STATE_SIZE), dtype=jnp.float32)
    out = jax.block_until_ready(critic_forward(state, params))
    ref = critic_reference(state, params)
    assert out.shape == (B, 1), out.shape
    assert jnp.allclose(out, ref, atol=1e-3, rtol=1e-3), "mismatch vs reference (B=8)"

    # Multi-tile + ragged last tile: B=160 with 128-row tiles -> 2 grid steps,
    # second tile reads 96 OOB rows (clamped) whose outputs are sliced off.
    B2 = 160
    state2 = jax.random.normal(k_state2, (B2, STATE_SIZE), dtype=jnp.float32)
    out2 = jax.block_until_ready(critic_forward(state2, params, block_b=128))
    ref2 = critic_reference(state2, params)
    assert out2.shape == (B2, 1), out2.shape
    assert jnp.allclose(out2, ref2, atol=1e-3, rtol=1e-3), "mismatch vs reference (B=160)"

    print("KERNEL_OK")
</pallas_src>

<mosaic_0001>
module attributes {stable_mosaic.version = 11 : i64} {
  func.func @critic_kernel(%arg0: i32, %arg1: memref<8x32xf32, #tpu.memory_space<vmem>>, %arg2: memref<32x512xbf16, #tpu.memory_space<vmem>>, %arg3: memref<1x512xf32, #tpu.memory_space<vmem>>, %arg4: memref<512x256xbf16, #tpu.memory_space<vmem>>, %arg5: memref<1x256xf32, #tpu.memory_space<vmem>>, %arg6: memref<1x256xf32, #tpu.memory_space<vmem>>, %arg7: memref<1x1xf32, #tpu.memory_space<vmem>>, %arg8: memref<1x8xf32, #tpu.memory_space<vmem>>) attributes {dimension_semantics = [#tpu.dimension_semantics<parallel>], iteration_bounds = array<i64: 1>, scalar_prefetch = 0 : i64, scratch_operands = 0 : i64, tpu.core_type = #tpu.core_type<tc>, window_params = [{transform_indices = @transform_0, window_bounds = array<i64: 8, 32>}, {pipeline_mode = #tpu.pipeline_mode<synchronous>, transform_indices = @transform_1, window_bounds = array<i64: 32, 512>}, {pipeline_mode = #tpu.pipeline_mode<synchronous>, transform_indices = @transform_2, window_bounds = array<i64: 1, 512>}, {pipeline_mode = #tpu.pipeline_mode<synchronous>, transform_indices = @transform_3, window_bounds = array<i64: 512, 256>}, {pipeline_mode = #tpu.pipeline_mode<synchronous>, transform_indices = @transform_4, window_bounds = array<i64: 1, 256>}, {pipeline_mode = #tpu.pipeline_mode<synchronous>, transform_indices = @transform_5, window_bounds = array<i64: 1, 256>}, {pipeline_mode = #tpu.pipeline_mode<synchronous>, transform_indices = @transform_6, window_bounds = array<i64: 1, 1>}, {transform_indices = @transform_7, window_bounds = array<i64: 1, 8>}]} {
    %c0 = arith.constant 0 : index
    %c0_0 = arith.constant 0 : index
    %0 = vector.load %arg1[%c0, %c0_0] : memref<8x32xf32, #tpu.memory_space<vmem>>, vector<8x32xf32>
    %1 = arith.truncf %0 : vector<8x32xf32> to vector<8x32xbf16>
    %c0_1 = arith.constant 0 : index
    %c0_2 = arith.constant 0 : index
    %2 = vector.load %arg2[%c0_1, %c0_2] : memref<32x512xbf16, #tpu.memory_space<vmem>>, vector<32x512xbf16>
    %cst = arith.constant dense<0.000000e+00> : vector<8x512xf32>
    %3 = tpu.matmul %1, %2, %cst {dimension_numbers = #tpu.dot_dimension_numbers<[1], [0], [0], [1], [0, 0, 1, 1], [], []>} : vector<8x32xbf16>, vector<32x512xbf16>, vector<8x512xf32> -> vector<8x512xf32>
    %c0_3 = arith.constant 0 : index
    %c0_4 = arith.constant 0 : index
    %4 = vector.load %arg3[%c0_3, %c0_4] : memref<1x512xf32, #tpu.memory_space<vmem>>, vector<1x512xf32>
    %5 = vector.broadcast %4 : vector<1x512xf32> to vector<8x512xf32>
    %6 = arith.addf %3, %5 : vector<8x512xf32>
    %cst_5 = arith.constant 0.000000e+00 : f32
    %7 = vector.broadcast %cst_5 : f32 to vector<8x512xf32>
    %8 = arith.maximumf %6, %7 : vector<8x512xf32>
    %9 = arith.truncf %8 : vector<8x512xf32> to vector<8x512xbf16>
    %c0_6 = arith.constant 0 : index
    %c0_7 = arith.constant 0 : index
    %10 = vector.load %arg4[%c0_6, %c0_7] : memref<512x256xbf16, #tpu.memory_space<vmem>>, vector<512x256xbf16>
    %cst_8 = arith.constant dense<0.000000e+00> : vector<8x256xf32>
    %11 = tpu.matmul %9, %10, %cst_8 {dimension_numbers = #tpu.dot_dimension_numbers<[1], [0], [0], [1], [0, 0, 1, 1], [], []>} : vector<8x512xbf16>, vector<512x256xbf16>, vector<8x256xf32> -> vector<8x256xf32>
    %c0_9 = arith.constant 0 : index
    %c0_10 = arith.constant 0 : index
    %12 = vector.load %arg5[%c0_9, %c0_10] : memref<1x256xf32, #tpu.memory_space<vmem>>, vector<1x256xf32>
    %13 = vector.broadcast %12 : vector<1x256xf32> to vector<8x256xf32>
    %14 = arith.addf %11, %13 : vector<8x256xf32>
    %cst_11 = arith.constant 0.000000e+00 : f32
    %15 = vector.broadcast %cst_11 : f32 to vector<8x256xf32>
    %16 = arith.maximumf %14, %15 : vector<8x256xf32>
    %c0_12 = arith.constant 0 : index
    %c0_13 = arith.constant 0 : index
    %17 = vector.load %arg6[%c0_12, %c0_13] : memref<1x256xf32, #tpu.memory_space<vmem>>, vector<1x256xf32>
    %18 = vector.broadcast %17 : vector<1x256xf32> to vector<8x256xf32>
    %19 = arith.mulf %16, %18 : vector<8x256xf32>
    %cst_14 = arith.constant dense<0.000000e+00> : vector<8xf32>
    %20 = vector.multi_reduction <add>, %19, %cst_14 [1] : vector<8x256xf32> to vector<8xf32>
    %21 = vector.shape_cast %20 : vector<8xf32> to vector<8x1xf32>
    %c0_15 = arith.constant 0 : index
    %c0_16 = arith.constant 0 : index
    %22 = vector.load %arg7[%c0_15, %c0_16] : memref<1x1xf32, #tpu.memory_space<vmem>>, vector<1x1xf32>
    %23 = vector.broadcast %22 : vector<1x1xf32> to vector<8x1xf32>
    %24 = arith.addf %21, %23 : vector<8x1xf32>
    %25 = tpu.transpose %24, [1, 0] : vector<8x1xf32> -> vector<1x8xf32>
    %c0_17 = arith.constant 0 : index
    %c0_18 = arith.constant 0 : index
    %26 = vector.load %arg8[%c0_17, %c0_18] : memref<1x8xf32, #tpu.memory_space<vmem>>, vector<1x8xf32>
    tpu.vector_store %arg8[%c0_17, %c0_18], %25 {strides = array<i32>} : memref<1x8xf32, #tpu.memory_space<vmem>>, vector<1x8xf32>,
    return
  }
  func.func @transform_0(%arg0: i32) -> (i32, i32) {
    %c0_i32 = arith.constant 0 : i32
    %c0_i32_0 = arith.constant 0 : i32
    return %arg0, %c0_i32 : i32, i32
  }
  func.func @transform_1(%arg0: i32) -> (i32, i32) {
    %c0_i32 = arith.constant 0 : i32
    %c0_i32_0 = arith.constant 0 : i32
    %c0_i32_1 = arith.constant 0 : i32
    return %c0_i32, %c0_i32_0 : i32, i32
  }
  func.func @transform_2(%arg0: i32) -> (i32, i32) {
    %c0_i32 = arith.constant 0 : i32
    %c0_i32_0 = arith.constant 0 : i32
    %c0_i32_1 = arith.constant 0 : i32
    return %c0_i32, %c0_i32_0 : i32, i32
  }
  func.func @transform_3(%arg0: i32) -> (i32, i32) {
    %c0_i32 = arith.constant 0 : i32
    %c0_i32_0 = arith.constant 0 : i32
    %c0_i32_1 = arith.constant 0 : i32
    return %c0_i32, %c0_i32_0 : i32, i32
  }
  func.func @transform_4(%arg0: i32) -> (i32, i32) {
    %c0_i32 = arith.constant 0 : i32
    %c0_i32_0 = arith.constant 0 : i32
    %c0_i32_1 = arith.constant 0 : i32
    return %c0_i32, %c0_i32_0 : i32, i32
  }
  func.func @transform_5(%arg0: i32) -> (i32, i32) {
    %c0_i32 = arith.constant 0 : i32
    %c0_i32_0 = arith.constant 0 : i32
    %c0_i32_1 = arith.constant 0 : i32
    return %c0_i32, %c0_i32_0 : i32, i32
  }
  func.func @transform_6(%arg0: i32) -> (i32, i32) {
    %c0_i32 = arith.constant 0 : i32
    %c0_i32_0 = arith.constant 0 : i32
    %c0_i32_1 = arith.constant 0 : i32
    return %c0_i32, %c0_i32_0 : i32, i32
  }
  func.func @transform_7(%arg0: i32) -> (i32, i32) {
    %c0_i32 = arith.constant 0 : i32
    %c0_i32_0 = arith.constant 0 : i32
    return %c0_i32, %arg0 : i32, i32
  }
}

</mosaic_0001>

<llo_original>
// kernel: tpu_custom_call.1
$region0: #{tpu_custom_call.1}
  #allocation0 [shape = 'u32[]', space=smem, size = 0x4, offset = 0x4, fixed_abs, tag = 'smem constant byte address 0x4 - core index']
  #allocation1 [shape = 'u32[144,128]{1,0:T(1,128)}', space=vmem, size = 0x12000, scoped, tag = 'internal scratch']
  #allocation2 [shape = 'f32[1,1]{1,0:T(1,128)S(1)}', space=vmem, size = 0x200, scoped, tag = 'scoped memory for tpu_custom_call.1']
  %s0 = inlined_call_operand.hbm [shape: f32[8,32], index: 0, kind: input, shape index: {}]
  %s1 = inlined_call_operand.hbm [shape: bf16[32,512], index: 1, kind: input, shape index: {}]
  %s2 = inlined_call_operand.vmem [shape: f32[1,512], index: 2, kind: input, shape index: {}]
  %s3 = inlined_call_operand.hbm [shape: bf16[512,256], index: 3, kind: input, shape index: {}]
  %s4 = inlined_call_operand.vmem [shape: f32[1,256], index: 4, kind: input, shape index: {}]
  %s5 = inlined_call_operand.vmem [shape: f32[1,256], index: 5, kind: input, shape index: {}]
  %s6 = inlined_call_operand.<no memory space> [shape: f32[1,1], index: 6, kind: input, shape index: {}]
  %s7 = inlined_call_operand.hbm [shape: f32[1,8], index: 7, kind: output, shape index: {}]
  %s8 = sld [smem:[#allocation0]]
  $region50: #{tpu_custom_call.1} parent=0
    _
  %s10 = ssub.s32 1, %s8
  %s11 = scalar_select 0, %s10, %s8
  %v12 = vstv %s6
  %13 = vst [vmem:[#allocation2] sm:$0x1] %v12
  $region1: #{tpu_custom_call.1} parent=0
    #allocation3 [shape = 'u8[4096]{0}', space=vmem, size = 0x1000, scoped, tag = 'input window, operand 0, single buffered']
    #allocation4 [shape = 's32[1]{0}', space=sflag, size = 0x4, scoped, tag = 'scoped memory for tpu_custom_call.1']
    #allocation5 [shape = 's32[1]{0}', space=sflag, size = 0x4, scoped, tag = 'scoped memory for tpu_custom_call.1']
    #allocation6 [shape = 'u8[32768]{0}', space=vmem, size = 0x8000, scoped, tag = 'input window, operand 1, single buffered']
    #allocation7 [shape = 's32[1]{0}', space=sflag, size = 0x4, scoped, tag = 'scoped memory for tpu_custom_call.1']
    #allocation8 [shape = 'u8[262144]{0}', space=vmem, size = 0x40000, scoped, tag = 'input window, operand 3, single buffered']
    #allocation9 [shape = 'u8[512]{0}', space=vmem, size = 0x400, scoped, tag = 'output window, operand 0, single buffered']
    %14 = vsyncpa [#allocation4], 0
    %15 = vsyncpa [#allocation7], 0
    %16 = vsyncpa [#allocation5], 0
    // Predicated region
    $region2: #{tpu_custom_call.1} parent=1 // pred_check
      _
    $region3: #{tpu_custom_call.1} parent=1 // pred_check_branch
      %18 = sbr.rel (0) target = $region5
    $region4: #{tpu_custom_call.1} parent=1 // pred_region
      %s20 = ssub.s32 128, 128
      %21 = vsyncadd [#allocation4], %s20
      %s23 = sshll.u32 [#allocation3], 4
      %s24 = int_to_ptr.vmem [resolvable:$true] %s23
      %26 = dma.hbm_to_vmem [thread:$0]  %s0, 128, %s24, [#allocation4]
    $region5: #{tpu_custom_call.1} parent=1 // pred_fallthru
      _
    // Predicated region
    $region6: #{tpu_custom_call.1} parent=1 // pred_check
      _
    $region7: #{tpu_custom_call.1} parent=1 // pred_check_branch
      %28 = sbr.rel (0) target = $region9
    $region8: #{tpu_custom_call.1} parent=1 // pred_region
      %s30 = ssub.s32 1024, 1024
      %31 = vsyncadd [#allocation7], %s30
      %s32 = sshll.u32 [#allocation6], 4
      %s33 = int_to_ptr.vmem [resolvable:$true] %s32
      %38 = dma.hbm_to_vmem [thread:$0]  %s1, 1024, %s33, [#allocation7], 256, 256, 16
    $region9: #{tpu_custom_call.1} parent=1 // pred_fallthru
      _
    // Predicated region
    $region10: #{tpu_custom_call.1} parent=1 // pred_check
      _
    $region11: #{tpu_custom_call.1} parent=1 // pred_check_branch
      %40 = sbr.rel (0) target = $region13
    $region12: #{tpu_custom_call.1} parent=1 // pred_region
      _
    $region13: #{tpu_custom_call.1} parent=1 // pred_fallthru
      _
    // Predicated region
    $region14: #{tpu_custom_call.1} parent=1 // pred_check
      _
    $region15: #{tpu_custom_call.1} parent=1 // pred_check_branch
      %42 = sbr.rel (0) target = $region17
    $region16: #{tpu_custom_call.1} parent=1 // pred_region
      %s44 = ssub.s32 8192, 8192
      %45 = vsyncadd [#allocation7], %s44
      %s46 = sshll.u32 [#allocation8], 4
      %s47 = int_to_ptr.vmem [resolvable:$true] %s46
      %52 = dma.hbm_to_vmem [thread:$0]  %s3, 8192, %s47, [#allocation7], 128, 128, 8
    $region17: #{tpu_custom_call.1} parent=1 // pred_fallthru
      _
    // Predicated region
    $region18: #{tpu_custom_call.1} parent=1 // pred_check
      _
    $region19: #{tpu_custom_call.1} parent=1 // pred_check_branch
      %54 = sbr.rel (0) target = $region21
    $region20: #{tpu_custom_call.1} parent=1 // pred_region
      _
    $region21: #{tpu_custom_call.1} parent=1 // pred_fallthru
      _
    // Predicated region
    $region22: #{tpu_custom_call.1} parent=1 // pred_check
      _
    $region23: #{tpu_custom_call.1} parent=1 // pred_check_branch
      %56 = sbr.rel (0) target = $region25
    $region24: #{tpu_custom_call.1} parent=1 // pred_region
      _
    $region25: #{tpu_custom_call.1} parent=1 // pred_fallthru
      _
    // Predicated region
    $region26: #{tpu_custom_call.1} parent=1 // pred_check
      _
    $region27: #{tpu_custom_call.1} parent=1 // pred_check_branch
      %58 = sbr.rel (0) target = $region29
    $region28: #{tpu_custom_call.1} parent=1 // pred_region
      _
    $region29: #{tpu_custom_call.1} parent=1 // pred_fallthru
      _
    // Predicated region
    $region30: #{tpu_custom_call.1} parent=1 // pred_check
      _
    $region31: #{tpu_custom_call.1} parent=1 // pred_check_branch
      %60 = sbr.rel (0) target = $region33
    $region32: #{tpu_custom_call.1} parent=1 // pred_region
      %61 = dma.done [#allocation4], 128
    $region33: #{tpu_custom_call.1} parent=1 // pred_fallthru
      _
    // Predicated region
    $region34: #{tpu_custom_call.1} parent=1 // pred_check
      _
    $region35: #{tpu_custom_call.1} parent=1 // pred_check_branch
      %63 = sbr.rel (0) target = $region37
    $region36: #{tpu_custom_call.1} parent=1 // pred_region
      %64 = dma.done [#allocation7], 1024
    $region37: #{tpu_custom_call.1} parent=1 // pred_fallthru
      _
    // Predicated region
    $region38: #{tpu_custom_call.1} parent=1 // pred_check
      _
    $region39: #{tpu_custom_call.1} parent=1 // pred_check_branch
      %66 = sbr.rel (0) target = $region41
    $region40: #{tpu_custom_call.1} parent=1 // pred_region
      %67 = dma.done [#allocation7], 8192
    $region41: #{tpu_custom_call.1} parent=1 // pred_fallthru
      _
    %v69 = vld [vmem:[#allocation3] sm:$0xff]
    %v70 = vpack.c.bf16 %v69, %v69
    %v71 = vld [vmem:[#allocation6] sm:$0xff]
    %v72 = vld [vmem:[#allocation6 + $0x8] sm:$0xff]
    %v73 = vld [vmem:[#allocation6 + $0x10] sm:$0xff]
    %v74 = vld [vmem:[#allocation6 + $0x18] sm:$0xff]
    %v75 = vld [vmem:[#allocation6 + $0x20] sm:$0xff]
    %v76 = vld [vmem:[#allocation6 + $0x28] sm:$0xff]
    %v77 = vld [vmem:[#allocation6 + $0x30] sm:$0xff]
    %v78 = vld [vmem:[#allocation6 + $0x38] sm:$0xff]
    %v79 = vld [vmem:[%s2] sm:$0xf]
    %v81 = vlaneseq
    %v82 = vshrl.u32 %v81, 7
    %v83 = vsub.s32 0, %v82
    %v84 = vrot.slane %v79, %v83
    %v85 = vlaneseq
    %v86 = vshrl.u32 %v85, 7
    %v87 = vsub.s32 1, %v86
    %v88 = vrot.slane %v79, %v87
    %v89 = vlaneseq
    %v90 = vshrl.u32 %v89, 7
    %v91 = vsub.s32 2, %v90
    %v92 = vrot.slane %v79, %v91
    %v93 = vlaneseq
    %v94 = vshrl.u32 %v93, 7
    %v95 = vsub.s32 3, %v94
    %v96 = vrot.slane %v79, %v95
    %v109 = vunpack.c.l.b16 %v71
    %v110 = vunpack.c.h.b16 %v71
    %v111 = vunpack.c.l.b16 %v72
    %v112 = vunpack.c.h.b16 %v72
    %v113 = vunpack.c.l.b16 %v73
    %v114 = vunpack.c.h.b16 %v73
    %v115 = vunpack.c.l.b16 %v74
    %v116 = vunpack.c.h.b16 %v74
    %v117 = vunpack.c.l.b16 %v75
    %v118 = vunpack.c.h.b16 %v75
    %v119 = vunpack.c.l.b16 %v76
    %v120 = vunpack.c.h.b16 %v76
    %v121 = vunpack.c.l.b16 %v77
    %v122 = vunpack.c.h.b16 %v77
    %v123 = vunpack.c.l.b16 %v78
    %v124 = vunpack.c.h.b16 %v78
    %v125 = vpack.c.b16 %v113, %v109
    %v126 = vpack.c.b16 %v114, %v110
    %v127 = vpack.c.b16 %v115, %v111
    %v128 = vpack.c.b16 %v116, %v112
    %v129 = vpack.c.b16 %v121, %v117
    %v130 = vpack.c.b16 %v122, %v118
    %v131 = vpack.c.b16 %v123, %v119
    %v132 = vpack.c.b16 %v124, %v120
    %vm141 = vcmask 261120
    %v143 = vsel %vm141, %v70, 0
    %145 = vmatprep.subr.bf16.mxu0 %v126
    %146 = vmatpush1.bf16.msra.mxu0 %v125
    %147 = vmatprep.subr.bf16.mxu0 %v130
    %148 = vmatpush1.bf16.msra.mxu0 %v129
    %149 = vmatprep.subr.bf16.mxu0 0
    %150 = vmatpush1.bf16.msra.mxu0 0
    %151 = vmatprep.subr.bf16.mxu0 0
    %152 = vmatpush1.bf16.msra.mxu0 0
    %153 = vmatprep.subr.bf16.mxu0 0
    %154 = vmatpush1.bf16.msra.mxu0 0
    %155 = vmatprep.subr.bf16.mxu0 0
    %156 = vmatpush1.bf16.msra.mxu0 0
    %157 = vmatprep.subr.bf16.mxu0 0
    %158 = vmatpush1.bf16.msra.mxu0 0
    %159 = vmatprep.subr.bf16.mxu0 0
    %160 = vmatpush1.bf16.msra.mxu0 0
    %161 = vmatprep.subr.bf16.mxu0 0
    %162 = vmatpush1.bf16.msra.mxu0 0
    %163 = vmatprep.subr.bf16.mxu0 0
    %164 = vmatpush1.bf16.msra.mxu0 0
    %165 = vmatprep.subr.bf16.mxu0 0
    %166 = vmatpush1.bf16.msra.mxu0 0
    %167 = vmatprep.subr.bf16.mxu0 0
    %168 = vmatpush1.bf16.msra.mxu0 0
    %169 = vmatprep.subr.bf16.mxu0 0
    %170 = vmatpush1.bf16.msra.mxu0 0
    %171 = vmatprep.subr.bf16.mxu0 0
    %172 = vmatpush1.bf16.msra.mxu0 0
    %173 = vmatprep.subr.bf16.mxu0 0
    %174 = vmatpush1.bf16.msra.mxu0 0
    %175 = vmatprep.subr.bf16.mxu0 0
    %176 = vmatpush1.bf16.msra.mxu0 0
    %177 = vmatprep.mubr.bf16.mxu0 0
    %178 = vmatmul.mubr.bf16.gmra.mrb[0].mxu0 %v143
    %v179 = vpop.f32.mrb[0].mxu0
    %v180 = vadd.f32 %v84, %v179
    %v181 = vpop.f32.mrb[0].mxu0
    %v182 = vadd.f32 %v88, %v181
    %v183 = vpop.f32.mrb[0].mxu0
    %v184 = vpop.f32.mrb[0].mxu0
    %185 = vdwg.mxu0
    %186 = vmatprep.subr.bf16.mxu0 %v128
    %187 = vmatpush1.bf16.msra.mxu0 %v127
    %188 = vmatprep.subr.bf16.mxu0 %v132
    %189 = vmatpush1.bf16.msra.mxu0 %v131
    %190 = vmatprep.subr.bf16.mxu0 0
    %191 = vmatpush1.bf16.msra.mxu0 0
    %192 = vmatprep.subr.bf16.mxu0 0
    %193 = vmatpush1.bf16.msra.mxu0 0
    %194 = vmatprep.subr.bf16.mxu0 0
    %195 = vmatpush1.bf16.msra.mxu0 0
    %196 = vmatprep.subr.bf16.mxu0 0
    %197 = vmatpush1.bf16.msra.mxu0 0
    %198 = vmatprep.subr.bf16.mxu0 0
    %199 = vmatpush1.bf16.msra.mxu0 0
    %200 = vmatprep.subr.bf16.mxu0 0
    %201 = vmatpush1.bf16.msra.mxu0 0
    %202 = vmatprep.subr.bf16.mxu0 0
    %203 = vmatpush1.bf16.msra.mxu0 0
    %204 = vmatprep.subr.bf16.mxu0 0
    %205 = vmatpush1.bf16.msra.mxu0 0
    %206 = vmatprep.subr.bf16.mxu0 0
    %207 = vmatpush1.bf16.msra.mxu0 0
    %208 = vmatprep.subr.bf16.mxu0 0
    %209 = vmatpush1.bf16.msra.mxu0 0
    %210 = vmatprep.subr.bf16.mxu0 0
    %211 = vmatpush1.bf16.msra.mxu0 0
    %212 = vmatprep.subr.bf16.mxu0 0
    %213 = vmatpush1.bf16.msra.mxu0 0
    %214 = vmatprep.subr.bf16.mxu0 0
    %215 = vmatpush1.bf16.msra.mxu0 0
    %216 = vmatprep.subr.bf16.mxu0 0
    %217 = vmatpush1.bf16.msra.mxu0 0
    %218 = vmatprep.mubr.bf16.mxu0 0
    %219 = vmatmul.mubr.bf16.gmra.mrb[0].mxu0 %v143
    %v220 = vpop.f32.mrb[0].mxu0
    %v221 = vadd.f32 %v92, %v220
    %v222 = vpop.f32.mrb[0].mxu0
    %v223 = vadd.f32 %v96, %v222
    %v224 = vpop.f32.mrb[0].mxu0
    %v225 = vpop.f32.mrb[0].mxu0
    %226 = vdwg.mxu0
    %v227 = vmax.f32 %v180, 0.0
    %v228 = vmax.f32 %v182, 0.0
    %v229 = vmax.f32 %v221, 0.0
    %v230 = vmax.f32 %v223, 0.0
    %v231 = vpack.c.bf16 %v227, %v227
    %v232 = vpack.c.bf16 %v228, %v228
    %v233 = vpack.c.bf16 %v229, %v229
    %v234 = vpack.c.bf16 %v230, %v230
    %v235 = vld [vmem:[#allocation8] sm:$0xff]
    %v236 = vld [vmem:[#allocation8 + $0x8] sm:$0xff]
    %v237 = vld [vmem:[#allocation8 + $0x10] sm:$0xff]
    %v238 = vld [vmem:[#allocation8 + $0x18] sm:$0xff]
    %v239 = vld [vmem:[#allocation8 + $0x20] sm:$0xff]
    %v240 = vld [vmem:[#allocation8 + $0x28] sm:$0xff]
    %v241 = vld [vmem:[#allocation8 + $0x30] sm:$0xff]
    %v242 = vld [vmem:[#allocation8 + $0x38] sm:$0xff]
    %v243 = vld [vmem:[#allocation8 + $0x40] sm:$0xff]
    %v244 = vld [vmem:[#allocation8 + $0x48] sm:$0xff]
    %v245 = vld [vmem:[#allocation8 + $0x50] sm:$0xff]
    %v246 = vld [vmem:[#allocation8 + $0x58] sm:$0xff]
    %v247 = vld [vmem:[#allocation8 + $0x60] sm:$0xff]
    %v248 = vld [vmem:[#allocation8 + $0x68] sm:$0xff]
    %v249 = vld [vmem:[#allocation8 + $0x70] sm:$0xff]
    %v250 = vld [vmem:[#allocation8 + $0x78] sm:$0xff]
    %v251 = vld [vmem:[#allocation8 + $0x80] sm:$0xff]
    %v252 = vld [vmem:[#allocation8 + $0x88] sm:$0xff]
    %v253 = vld [vmem:[#allocation8 + $0x90] sm:$0xff]
    %v254 = vld [vmem:[#allocation8 + $0x98] sm:$0xff]
    %v255 = vld [vmem:[#allocation8 + $0xa0] sm:$0xff]
    %v256 = vld [vmem:[#allocation8 + $0xa8] sm:$0xff]
    %v257 = vld [vmem:[#allocation8 + $0xb0] sm:$0xff]
    %v258 = vld [vmem:[#allocation8 + $0xb8] sm:$0xff]
    %v259 = vld [vmem:[#allocation8 + $0xc0] sm:$0xff]
    %v260 = vld [vmem:[#allocation8 + $0xc8] sm:$0xff]
    %v261 = vld [vmem:[#allocation8 + $0xd0] sm:$0xff]
    %v262 = vld [vmem:[#allocation8 + $0xd8] sm:$0xff]
    %v263 = vld [vmem:[#allocation8 + $0xe0] sm:$0xff]
    %v264 = vld [vmem:[#allocation8 + $0xe8] sm:$0xff]
    %v265 = vld [vmem:[#allocation8 + $0xf0] sm:$0xff]
    %v266 = vld [vmem:[#allocation8 + $0xf8] sm:$0xff]
    %v267 = vld [vmem:[#allocation8 + $0x100] sm:$0xff]
    %v268 = vld [vmem:[#allocation8 + $0x108] sm:$0xff]
    %v269 = vld [vmem:[#allocation8 + $0x110] sm:$0xff]
    %v270 = vld [vmem:[#allocation8 + $0x118] sm:$0xff]
    %v271 = vld [vmem:[#allocation8 + $0x120] sm:$0xff]
    %v272 = vld [vmem:[#allocation8 + $0x128] sm:$0xff]
    %v273 = vld [vmem:[#allocation8 + $0x130] sm:$0xff]
    %v274 = vld [vmem:[#allocation8 + $0x138] sm:$0xff]
    %v275 = vld [vmem:[#allocation8 + $0x140] sm:$0xff]
    %v276 = vld [vmem:[#allocation8 + $0x148] sm:$0xff]
    %v277 = vld [vmem:[#allocation8 + $0x150] sm:$0xff]
    %v278 = vld [vmem:[#allocation8 + $0x158] sm:$0xff]
    %v279 = vld [vmem:[#allocation8 + $0x160] sm:$0xff]
    %v280 = vld [vmem:[#allocation8 + $0x168] sm:$0xff]
    %v281 = vld [vmem:[#allocation8 + $0x170] sm:$0xff]
    %v282 = vld [vmem:[#allocation8 + $0x178] sm:$0xff]
    %v283 = vld [vmem:[#allocation8 + $0x180] sm:$0xff]
    %v284 = vld [vmem:[#allocation8 + $0x188] sm:$0xff]
    %v285 = vld [vmem:[#allocation8 + $0x190] sm:$0xff]
    %v286 = vld [vmem:[#allocation8 + $0x198] sm:$0xff]
    %v287 = vld [vmem:[#allocation8 + $0x1a0] sm:$0xff]
    %v288 = vld [vmem:[#allocation8 + $0x1a8] sm:$0xff]
    %v289 = vld [vmem:[#allocation8 + $0x1b0] sm:$0xff]
    %v290 = vld [vmem:[#allocation8 + $0x1b8] sm:$0xff]
    %v291 = vld [vmem:[#allocation8 + $0x1c0] sm:$0xff]
    %v292 = vld [vmem:[#allocation8 + $0x1c8] sm:$0xff]
    %v293 = vld [vmem:[#allocation8 + $0x1d0] sm:$0xff]
    %v294 = vld [vmem:[#allocation8 + $0x1d8] sm:$0xff]
    %v295 = vld [vmem:[#allocation8 + $0x1e0] sm:$0xff]
    %v296 = vld [vmem:[#allocation8 + $0x1e8] sm:$0xff]
    %v297 = vld [vmem:[#allocation8 + $0x1f0] sm:$0xff]
    %v298 = vld [vmem:[#allocation8 + $0x1f8] sm:$0xff]
    %v299 = vld [vmem:[%s4] sm:$0x3]
    %v301 = vlaneseq
    %v302 = vshrl.u32 %v301, 7
    %v303 = vsub.s32 0, %v302
    %v304 = vrot.slane %v299, %v303
    %v305 = vlaneseq
    %v306 = vshrl.u32 %v305, 7
    %v307 = vsub.s32 1, %v306
    %v308 = vrot.slane %v299, %v307
    %v375 = vunpack.c.l.b16 %v235
    %v376 = vunpack.c.h.b16 %v235
    %v377 = vunpack.c.l.b16 %v236
    %v378 = vunpack.c.h.b16 %v236
    %v379 = vunpack.c.l.b16 %v237
    %v380 = vunpack.c.h.b16 %v237
    %v381 = vunpack.c.l.b16 %v238
    %v382 = vunpack.c.h.b16 %v238
    %v383 = vunpack.c.l.b16 %v239
    %v384 = vunpack.c.h.b16 %v239
    %v385 = vunpack.c.l.b16 %v240
    %v386 = vunpack.c.h.b16 %v240
    %v387 = vunpack.c.l.b16 %v241
    %v388 = vunpack.c.h.b16 %v241
    %v389 = vunpack.c.l.b16 %v242
    %v390 = vunpack.c.h.b16 %v242
    %v391 = vunpack.c.l.b16 %v243
    %v392 = vunpack.c.h.b16 %v243
    %v393 = vunpack.c.l.b16 %v244
    %v394 = vunpack.c.h.b16 %v244
    %v395 = vunpack.c.l.b16 %v245
    %v396 = vunpack.c.h.b16 %v245
    %v397 = vunpack.c.l.b16 %v246
    %v398 = vunpack.c.h.b16 %v246
    %v399 = vunpack.c.l.b16 %v247
    %v400 = vunpack.c.h.b16 %v247
    %v401 = vunpack.c.l.b16 %v248
    %v402 = vunpack.c.h.b16 %v248
    %v403 = vunpack.c.l.b16 %v249
    %v404 = vunpack.c.h.b16 %v249
    %v405 = vunpack.c.l.b16 %v250
    %v406 = vunpack.c.h.b16 %v250
    %v407 = vunpack.c.l.b16 %v251
    %v408 = vunpack.c.h.b16 %v251
    %v409 = vunpack.c.l.b16 %v252
    %v410 = vunpack.c.h.b16 %v252
    %v411 = vunpack.c.l.b16 %v253
    %v412 = vunpack.c.h.b16 %v253
    %v413 = vunpack.c.l.b16 %v254
    %v414 = vunpack.c.h.b16 %v254
    %v415 = vunpack.c.l.b16 %v255
    %v416 = vunpack.c.h.b16 %v255
    %v417 = vunpack.c.l.b16 %v256
    %v418 = vunpack.c.h.b16 %v256
    %v419 = vunpack.c.l.b16 %v257
    %v420 = vunpack.c.h.b16 %v257
    %v421 = vunpack.c.l.b16 %v258
    %v422 = vunpack.c.h.b16 %v258
    %v423 = vunpack.c.l.b16 %v259
    %v424 = vunpack.c.h.b16 %v259
    %v425 = vunpack.c.l.b16 %v260
    %v426 = vunpack.c.h.b16 %v260
    %v427 = vunpack.c.l.b16 %v261
    %v428 = vunpack.c.h.b16 %v261
    %v429 = vunpack.c.l.b16 %v262
    %v430 = vunpack.c.h.b16 %v262
    %v431 = vunpack.c.l.b16 %v263
    %v432 = vunpack.c.h.b16 %v263
    %v433 = vunpack.c.l.b16 %v264
    %v434 = vunpack.c.h.b16 %v264
    %v435 = vunpack.c.l.b16 %v265
    %v436 = vunpack.c.h.b16 %v265
    %v437 = vunpack.c.l.b16 %v266
    %v438 = vunpack.c.h.b16 %v266
    %v439 = vunpack.c.l.b16 %v267
    %v440 = vunpack.c.h.b16 %v267
    %v441 = vunpack.c.l.b16 %v268
    %v442 = vunpack.c.h.b16 %v268
    %v443 = vunpack.c.l.b16 %v269
    %v444 = vunpack.c.h.b16 %v269
    %v445 = vunpack.c.l.b16 %v270
    %v446 = vunpack.c.h.b16 %v270
    %v447 = vunpack.c.l.b16 %v271
    %v448 = vunpack.c.h.b16 %v271
    %v449 = vunpack.c.l.b16 %v272
    %v450 = vunpack.c.h.b16 %v272
    %v451 = vunpack.c.l.b16 %v273
    %v452 = vunpack.c.h.b16 %v273
    %v453 = vunpack.c.l.b16 %v274
    %v454 = vunpack.c.h.b16 %v274
    %v455 = vunpack.c.l.b16 %v275
    %v456 = vunpack.c.h.b16 %v275
    %v457 = vunpack.c.l.b16 %v276
    %v458 = vunpack.c.h.b16 %v276
    %v459 = vunpack.c.l.b16 %v277
    %v460 = vunpack.c.h.b16 %v277
    %v461 = vunpack.c.l.b16 %v278
    %v462 = vunpack.c.h.b16 %v278
    %v463 = vunpack.c.l.b16 %v279
    %v464 = vunpack.c.h.b16 %v279
    %v465 = vunpack.c.l.b16 %v280
    %v466 = vunpack.c.h.b16 %v280
    %v467 = vunpack.c.l.b16 %v281
    %v468 = vunpack.c.h.b16 %v281
    %v469 = vunpack.c.l.b16 %v282
    %v470 = vunpack.c.h.b16 %v282
    %v471 = vunpack.c.l.b16 %v283
    %v472 = vunpack.c.h.b16 %v283
    %v473 = vunpack.c.l.b16 %v284
    %v474 = vunpack.c.h.b16 %v284
    %v475 = vunpack.c.l.b16 %v285
    %v476 = vunpack.c.h.b16 %v285
    %v477 = vunpack.c.l.b16 %v286
    %v478 = vunpack.c.h.b16 %v286
    %v479 = vunpack.c.l.b16 %v287
    %v480 = vunpack.c.h.b16 %v287
    %v481 = vunpack.c.l.b16 %v288
    %v482 = vunpack.c.h.b16 %v288
    %v483 = vunpack.c.l.b16 %v289
    %v484 = vunpack.c.h.b16 %v289
    %v485 = vunpack.c.l.b16 %v290
    %v486 = vunpack.c.h.b16 %v290
    %v487 = vunpack.c.l.b16 %v291
    %v488 = vunpack.c.h.b16 %v291
    %v489 = vunpack.c.l.b16 %v292
    %v490 = vunpack.c.h.b16 %v292
    %v491 = vunpack.c.l.b16 %v293
    %v492 = vunpack.c.h.b16 %v293
    %v493 = vunpack.c.l.b16 %v294
    %v494 = vunpack.c.h.b16 %v294
    %v495 = vunpack.c.l.b16 %v295
    %v496 = vunpack.c.h.b16 %v295
    %v497 = vunpack.c.l.b16 %v296
    %v498 = vunpack.c.h.b16 %v296
    %v499 = vunpack.c.l.b16 %v297
    %v500 = vunpack.c.h.b16 %v297
    %v501 = vunpack.c.l.b16 %v298
    %v502 = vunpack.c.h.b16 %v298
    %v503 = vpack.c.b16 %v377, %v375
    %v504 = vpack.c.b16 %v378, %v376
    %v505 = vpack.c.b16 %v381, %v379
    %v506 = vpack.c.b16 %v382, %v380
    %v507 = vpack.c.b16 %v385, %v383
    %v508 = vpack.c.b16 %v386, %v384
    %v509 = vpack.c.b16 %v389, %v387
    %v510 = vpack.c.b16 %v390, %v388
    %v511 = vpack.c.b16 %v393, %v391
    %v512 = vpack.c.b16 %v394, %v392
    %v513 = vpack.c.b16 %v397, %v395
    %v514 = vpack.c.b16 %v398, %v396
    %v515 = vpack.c.b16 %v401, %v399
    %v516 = vpack.c.b16 %v402, %v400
    %v517 = vpack.c.b16 %v405, %v403
    %v518 = vpack.c.b16 %v406, %v404
    %v519 = vpack.c.b16 %v409, %v407
    %v520 = vpack.c.b16 %v410, %v408
    %v521 = vpack.c.b16 %v413, %v411
    %v522 = vpack.c.b16 %v414, %v412
    %v523 = vpack.c.b16 %v417, %v415
    %v524 = vpack.c.b16 %v418, %v416
    %v525 = vpack.c.b16 %v421, %v419
    %v526 = vpack.c.b16 %v422, %v420
    %v527 = vpack.c.b16 %v425, %v423
    %v528 = vpack.c.b16 %v426, %v424
    %v529 = vpack.c.b16 %v429, %v427
    %v530 = vpack.c.b16 %v430, %v428
    %v531 = vpack.c.b16 %v433, %v431
    %v532 = vpack.c.b16 %v434, %v432
    %v533 = vpack.c.b16 %v437, %v435
    %v534 = vpack.c.b16 %v438, %v436
    %v535 = vpack.c.b16 %v441, %v439
    %v536 = vpack.c.b16 %v442, %v440
    %v537 = vpack.c.b16 %v445, %v443
    %v538 = vpack.c.b16 %v446, %v444
    %v539 = vpack.c.b16 %v449, %v447
    %v540 = vpack.c.b16 %v450, %v448
    %v541 = vpack.c.b16 %v453, %v451
    %v542 = vpack.c.b16 %v454, %v452
    %v543 = vpack.c.b16 %v457, %v455
    %v544 = vpack.c.b16 %v458, %v456
    %v545 = vpack.c.b16 %v461, %v459
    %v546 = vpack.c.b16 %v462, %v460
    %v547 = vpack.c.b16 %v465, %v463
    %v548 = vpack.c.b16 %v466, %v464
    %v549 = vpack.c.b16 %v469, %v467
    %v550 = vpack.c.b16 %v470, %v468
    %v551 = vpack.c.b16 %v473, %v471
    %v552 = vpack.c.b16 %v474, %v472
    %v553 = vpack.c.b16 %v477, %v475
    %v554 = vpack.c.b16 %v478, %v476
    %v555 = vpack.c.b16 %v481, %v479
    %v556 = vpack.c.b16 %v482, %v480
    %v557 = vpack.c.b16 %v485, %v483
    %v558 = vpack.c.b16 %v486, %v484
    %v559 = vpack.c.b16 %v489, %v487
    %v560 = vpack.c.b16 %v490, %v488
    %v561 = vpack.c.b16 %v493, %v491
    %v562 = vpack.c.b16 %v494, %v492
    %v563 = vpack.c.b16 %v497, %v495
    %v564 = vpack.c.b16 %v498, %v496
    %v565 = vpack.c.b16 %v501, %v499
    %v566 = vpack.c.b16 %v502, %v500
    %631 = vmatprep.subr.bf16.mxu0 %v504
    %632 = vmatpush1.bf16.msra.mxu0 %v503
    %633 = vmatprep.subr.bf16.mxu0 %v506
    %634 = vmatpush1.bf16.msra.mxu0 %v505
    %635 = vmatprep.subr.bf16.mxu0 %v508
    %636 = vmatpush1.bf16.msra.mxu0 %v507
    %637 = vmatprep.subr.bf16.mxu0 %v510
    %638 = vmatpush1.bf16.msra.mxu0 %v509
    %639 = vmatprep.subr.bf16.mxu0 %v512
    %640 = vmatpush1.bf16.msra.mxu0 %v511
    %641 = vmatprep.subr.bf16.mxu0 %v514
    %642 = vmatpush1.bf16.msra.mxu0 %v513
    %643 = vmatprep.subr.bf16.mxu0 %v516
    %644 = vmatpush1.bf16.msra.mxu0 %v515
    %645 = vmatprep.subr.bf16.mxu0 %v518
    %646 = vmatpush1.bf16.msra.mxu0 %v517
    %647 = vmatprep.subr.bf16.mxu0 %v520
    %648 = vmatpush1.bf16.msra.mxu0 %v519
    %649 = vmatprep.subr.bf16.mxu0 %v522
    %650 = vmatpush1.bf16.msra.mxu0 %v521
    %651 = vmatprep.subr.bf16.mxu0 %v524
    %652 = vmatpush1.bf16.msra.mxu0 %v523
    %653 = vmatprep.subr.bf16.mxu0 %v526
    %654 = vmatpush1.bf16.msra.mxu0 %v525
    %655 = vmatprep.subr.bf16.mxu0 %v528
    %656 = vmatpush1.bf16.msra.mxu0 %v527
    %657 = vmatprep.subr.bf16.mxu0 %v530
    %658 = vmatpush1.bf16.msra.mxu0 %v529
    %659 = vmatprep.subr.bf16.mxu0 %v532
    %660 = vmatpush1.bf16.msra.mxu0 %v531
    %661 = vmatprep.subr.bf16.mxu0 %v534
    %662 = vmatpush1.bf16.msra.mxu0 %v533
    %663 = vmatprep.mubr.bf16.mxu0 %v232
    %664 = vmatmul.mubr.bf16.gmra.mrb[0].mxu0 %v231
    %v665 = vpop.f32.mrb[0].mxu0
    %v666 = vadd.f32 %v304, %v665
    %v667 = vpop.f32.mrb[0].mxu0
    %v668 = vadd.f32 %v308, %v667
    %v669 = vpop.f32.mrb[0].mxu0
    %v670 = vpop.f32.mrb[0].mxu0
    %671 = vdwg.mxu0
    %672 = vmatprep.subr.bf16.mxu0 %v536
    %673 = vmatpush1.bf16.msra.mxu0 %v535
    %674 = vmatprep.subr.bf16.mxu0 %v538
    %675 = vmatpush1.bf16.msra.mxu0 %v537
    %676 = vmatprep.subr.bf16.mxu0 %v540
    %677 = vmatpush1.bf16.msra.mxu0 %v539
    %678 = vmatprep.subr.bf16.mxu0 %v542
    %679 = vmatpush1.bf16.msra.mxu0 %v541
    %680 = vmatprep.subr.bf16.mxu0 %v544
    %681 = vmatpush1.bf16.msra.mxu0 %v543
    %682 = vmatprep.subr.bf16.mxu0 %v546
    %683 = vmatpush1.bf16.msra.mxu0 %v545
    %684 = vmatprep.subr.bf16.mxu0 %v548
    %685 = vmatpush1.bf16.msra.mxu0 %v547
    %686 = vmatprep.subr.bf16.mxu0 %v550
    %687 = vmatpush1.bf16.msra.mxu0 %v549
    %688 = vmatprep.subr.bf16.mxu0 %v552
    %689 = vmatpush1.bf16.msra.mxu0 %v551
    %690 = vmatprep.subr.bf16.mxu0 %v554
    %691 = vmatpush1.bf16.msra.mxu0 %v553
    %692 = vmatprep.subr.bf16.mxu0 %v556
    %693 = vmatpush1.bf16.msra.mxu0 %v555
    %694 = vmatprep.subr.bf16.mxu0 %v558
    %695 = vmatpush1.bf16.msra.mxu0 %v557
    %696 = vmatprep.subr.bf16.mxu0 %v560
    %697 = vmatpush1.bf16.msra.mxu0 %v559
    %698 = vmatprep.subr.bf16.mxu0 %v562
    %699 = vmatpush1.bf16.msra.mxu0 %v561
    %700 = vmatprep.subr.bf16.mxu0 %v564
    %701 = vmatpush1.bf16.msra.mxu0 %v563
    %702 = vmatprep.subr.bf16.mxu0 %v566
    %703 = vmatpush1.bf16.msra.mxu0 %v565
    %704 = vmatprep.mubr.bf16.mxu0 %v234
    %705 = vmatmul.mubr.bf16.gmra.mrb[0].mxu0 %v233
    %v706 = vpop.f32.mrb[0].mxu0
    %v707 = vadd.f32 %v666, %v706
    %v708 = vpop.f32.mrb[0].mxu0
    %v709 = vadd.f32 %v668, %v708
    %v710 = vpop.f32.mrb[0].mxu0
    %v711 = vpop.f32.mrb[0].mxu0
    %712 = vdwg.mxu0
    %v713 = vmax.f32 %v707, 0.0
    %v714 = vmax.f32 %v709, 0.0
    %v715 = vld [vmem:[%s5] sm:$0x3]
    %v717 = vlaneseq
    %v718 = vshrl.u32 %v717, 7
    %v719 = vsub.s32 0, %v718
    %v720 = vrot.slane %v715, %v719
    %v721 = vlaneseq
    %v722 = vshrl.u32 %v721, 7
    %v723 = vsub.s32 1, %v722
    %v724 = vrot.slane %v715, %v723
    %v727 = vmul.f32 %v713, %v720
    %v728 = vmul.f32 %v714, %v724
    %v729 = vadd.f32 %v727, %v728
    %730 = vadd.xlane.f32.xlu0 %v729
    %v731 = vpop.xlane.xlu0 %730
    %v732 = vld [vmem:[#allocation2] sm:$0x1]
    %v734 = vlaneseq
    %v735 = vshrl.u32 %v734, 7
    %v736 = vsub.s32 0, %v735
    %v737 = vrot.slane %v732, %v736
    %v739 = vadd.f32 %v731, %v737
    %740 = vxpose.xlu0.b32.start [1/16] %v739, 128
    %741 = vxpose.xlu0.b32.cont [2/16] 0.0, 128
    %742 = vxpose.xlu0.b32.cont [3/16] 0.0, 128
    %743 = vxpose.xlu0.b32.cont [4/16] 0.0, 128
    %744 = vxpose.xlu0.b32.cont [5/16] 0.0, 128
    %745 = vxpose.xlu0.b32.cont [6/16] 0.0, 128
    %746 = vxpose.xlu0.b32.cont [7/16] 0.0, 128
    %747 = vxpose.xlu0.b32.cont [8/16] 0.0, 128
    %748 = vxpose.xlu0.b32.cont [9/16] 0.0, 128
    %749 = vxpose.xlu0.b32.cont [10/16] 0.0, 128
    %750 = vxpose.xlu0.b32.cont [11/16] 0.0, 128
    %751 = vxpose.xlu0.b32.cont [12/16] 0.0, 128
    %752 = vxpose.xlu0.b32.cont [13/16] 0.0, 128
    %753 = vxpose.xlu0.b32.cont [14/16] 0.0, 128
    %754 = vxpose.xlu0.b32.cont [15/16] 0.0, 128
    %755 = vxpose.xlu0.b32.end [16/16] 0.0, 128
    %v756 = vpop.trf.xlu0
    %v757 = vpop.trf.xlu0
    %v758 = vpop.trf.xlu0
    %v759 = vpop.trf.xlu0
    %v760 = vpop.trf.xlu0
    %v761 = vpop.trf.xlu0
    %v762 = vpop.trf.xlu0
    %v763 = vpop.trf.xlu0
    %v764 = vpop.trf.xlu0
    %v765 = vpop.trf.xlu0
    %v766 = vpop.trf.xlu0
    %v767 = vpop.trf.xlu0
    %v768 = vpop.trf.xlu0
    %v769 = vpop.trf.xlu0
    %v770 = vpop.trf.xlu0
    %v771 = vpop.trf.xlu0
    %vm772 = vcmask 57344
    %773 = vst.msk [vmem:[#allocation9] sm:$0x1] %vm772, %v756
    // Predicated region
    $region42: #{tpu_custom_call.1} parent=1 // pred_check
      _
    $region43: #{tpu_custom_call.1} parent=1 // pred_check_branch
      %775 = sbr.rel (0) target = $region45
    $region44: #{tpu_custom_call.1} parent=1 // pred_region
      %s777 = ssub.s32 16, 16
      %778 = vsyncadd [#allocation5], %s777
      %s780 = sshll.u32 [#allocation9], 4
      %s781 = int_to_ptr.vmem [resolvable:$true] %s780
      %783 = dma.vmem_to_hbm [thread:$0]  %s781, 16, %s7, [#allocation5]
    $region45: #{tpu_custom_call.1} parent=1 // pred_fallthru
      _
    // Predicated region
    $region46: #{tpu_custom_call.1} parent=1 // pred_check
      _
    $region47: #{tpu_custom_call.1} parent=1 // pred_check_branch
      %785 = sbr.rel (0) target = $region49
    $region48: #{tpu_custom_call.1} parent=1 // pred_region
      %786 = dma.done [#allocation5], 16
    $region49: #{tpu_custom_call.1} parent=1 // pred_fallthru
      _
    %787 = vsyncpa [#allocation4], 1
    %788 = vsyncpa [#allocation7], 1
    %789 = vsyncpa [#allocation5], 1

</llo_original>
